<compile_context>
chip_gen: v5e
topology: v5e:2x2
jax: 0.10.0
libtpu: 0.0.40
codegen_flags: <defaults>
</compile_context>

<pallas_src>
import functools

import jax
import jax.numpy as jnp
from jax.experimental import pallas as pl
from jax.experimental.pallas import tpu as pltpu

PI = 3.1415927410125732  # same float constant the PyTorch code uses


def _pos_map_kernel(x_ref, o_ref, *, L, scale):
    # x_ref : (TB, D)              VMEM
    # o_ref : (TB, D*(2L+1))       VMEM
    x = x_ref[...]

    if scale != 1.0:
        xs = x * jnp.asarray(scale, x.dtype)
    else:
        xs = x

    # Build the full output slab in-register; one lane-dense store at the end.
    parts = [xs]
    for i in range(L):  # static Python loop -> fully unrolled
        xf = jnp.asarray((2.0 ** i) * PI, xs.dtype) * xs
        parts.append(jnp.sin(xf))
        parts.append(jnp.cos(xf))
    out = jnp.concatenate(parts, axis=-1)

    if scale != 1.0:
        out = out / jnp.asarray(scale, out.dtype)

    o_ref[...] = out.astype(o_ref.dtype)


def positional_mapping(x, *, L=5, scale=1.0, block_rows=1024):
    """Pallas TPU implementation of PositionalMapping.forward.

    x: (B, D) array. Returns (B, D*(2L+1)), or x*scale if L == 0 (matching the
    PyTorch early-return, which does NOT divide back by scale).
    """
    if L == 0:
        return x * scale

    B, D = x.shape
    out_dim = D * (2 * L + 1)
    itemsize = jnp.dtype(x.dtype).itemsize

    # Row-tile size: multiple of the sublane packing (8 for 32-bit, 16 for
    # bf16), or the whole batch if it already fits in one small block.
    min_rows = 16 if x.dtype == jnp.bfloat16 else 8
    if B <= block_rows:
        tb = B                      # full-extent block (allowed even if ragged)
    else:
        tb = max((block_rows // min_rows) * min_rows, min_rows)

    grid = (pl.cdiv(B, tb),)

    kernel = functools.partial(_pos_map_kernel, L=L, scale=scale)

    cost = pl.CostEstimate(
        flops=B * D * (L + 1) + B * out_dim,       # scale + freq muls + unscale
        transcendentals=2 * L * B * D,             # sin + cos bank
        bytes_accessed=B * D * itemsize + B * out_dim * itemsize,
    )

    return pl.pallas_call(
        kernel,
        out_shape=jax.ShapeDtypeStruct((B, out_dim), x.dtype),
        grid=grid,
        in_specs=[pl.BlockSpec((tb, D), lambda i: (i, 0))],
        out_specs=pl.BlockSpec((tb, out_dim), lambda i: (i, 0)),
        compiler_params=pltpu.CompilerParams(
            dimension_semantics=("parallel",)),
        cost_estimate=cost,
    )(x)


def _reference(x, L=5, scale=1.0):
    x = x * scale
    if L == 0:
        return x
    h = [x]
    for i in range(L):
        h.append(jnp.sin((2.0 ** i) * PI * x))
        h.append(jnp.cos((2.0 ** i) * PI * x))
    return jnp.concatenate(h, axis=-1) / scale


if __name__ == "__main__":
    key = jax.random.PRNGKey(0)

    # Case 1: small batch, single full-extent block, scale == 1.0 fast path.
    B, D, L, scale = 8, 16, 5, 1.0
    x = jax.random.normal(key, (B, D), dtype=jnp.float32)
    out = jax.block_until_ready(positional_mapping(x, L=L, scale=scale))
    ref = _reference(x, L=L, scale=scale)
    assert out.shape == (B, D * (2 * L + 1))
    assert jnp.allclose(out, ref, atol=1e-5, rtol=1e-5)

    # Case 2: tiled batch axis with a ragged last tile (40 = 16 + 16 + 8) and
    # a non-trivial scale, exercising the pipelined / masked-edge path.
    B2, D2, L2, scale2 = 40, 16, 3, 2.0
    x2 = jax.random.normal(jax.random.PRNGKey(1), (B2, D2), dtype=jnp.float32)
    out2 = jax.block_until_ready(
        positional_mapping(x2, L=L2, scale=scale2, block_rows=16))
    ref2 = _reference(x2, L=L2, scale=scale2)
    assert out2.shape == (B2, D2 * (2 * L2 + 1))
    assert jnp.allclose(out2, ref2, atol=1e-5, rtol=1e-5)

    # Case 3: L == 0 early-return semantics (no divide-back, no kernel).
    out3 = jax.block_until_ready(positional_mapping(x, L=0, scale=3.0))
    assert jnp.allclose(out3, x * 3.0, atol=1e-6, rtol=1e-6)

    print("KERNEL_OK")
</pallas_src>

<mosaic_0001>
module attributes {stable_mosaic.version = 11 : i64} {
  func.func @_pos_map_kernel(%arg0: i32, %arg1: memref<8x16xf32, #tpu.memory_space<vmem>>, %arg2: memref<8x176xf32, #tpu.memory_space<vmem>>) attributes {dimension_semantics = [#tpu.dimension_semantics<parallel>], iteration_bounds = array<i64: 1>, scalar_prefetch = 0 : i64, scratch_operands = 0 : i64, tpu.core_type = #tpu.core_type<tc>, window_params = [{transform_indices = @transform_0, window_bounds = array<i64: 8, 16>}, {transform_indices = @transform_1, window_bounds = array<i64: 8, 176>}]} {
    %c0 = arith.constant 0 : index
    %c0_0 = arith.constant 0 : index
    %0 = vector.load %arg1[%c0, %c0_0] : memref<8x16xf32, #tpu.memory_space<vmem>>, vector<8x16xf32>
    %cst = arith.constant 3.14159274 : f32
    %1 = vector.broadcast %cst : f32 to vector<8x16xf32>
    %2 = arith.mulf %1, %0 : vector<8x16xf32>
    %3 = math.sin %2 : vector<8x16xf32>
    %4 = math.cos %2 : vector<8x16xf32>
    %cst_1 = arith.constant 6.28318548 : f32
    %5 = vector.broadcast %cst_1 : f32 to vector<8x16xf32>
    %6 = arith.mulf %5, %0 : vector<8x16xf32>
    %7 = math.sin %6 : vector<8x16xf32>
    %8 = math.cos %6 : vector<8x16xf32>
    %cst_2 = arith.constant 12.566371 : f32
    %9 = vector.broadcast %cst_2 : f32 to vector<8x16xf32>
    %10 = arith.mulf %9, %0 : vector<8x16xf32>
    %11 = math.sin %10 : vector<8x16xf32>
    %12 = math.cos %10 : vector<8x16xf32>
    %cst_3 = arith.constant 25.1327419 : f32
    %13 = vector.broadcast %cst_3 : f32 to vector<8x16xf32>
    %14 = arith.mulf %13, %0 : vector<8x16xf32>
    %15 = math.sin %14 : vector<8x16xf32>
    %16 = math.cos %14 : vector<8x16xf32>
    %cst_4 = arith.constant 50.2654839 : f32
    %17 = vector.broadcast %cst_4 : f32 to vector<8x16xf32>
    %18 = arith.mulf %17, %0 : vector<8x16xf32>
    %19 = math.sin %18 : vector<8x16xf32>
    %20 = math.cos %18 : vector<8x16xf32>
    %21 = tpu.concatenate %0, %3, %4, %7, %8, %11, %12, %15, %16, %19, %20 in 1 : vector<8x16xf32>, vector<8x16xf32>, vector<8x16xf32>, vector<8x16xf32>, vector<8x16xf32>, vector<8x16xf32>, vector<8x16xf32>, vector<8x16xf32>, vector<8x16xf32>, vector<8x16xf32>, vector<8x16xf32> -> vector<8x176xf32>
    %c0_5 = arith.constant 0 : index
    %c0_6 = arith.constant 0 : index
    %22 = vector.load %arg2[%c0_5, %c0_6] : memref<8x176xf32, #tpu.memory_space<vmem>>, vector<8x176xf32>
    tpu.vector_store %arg2[%c0_5, %c0_6], %21 {strides = array<i32>} : memref<8x176xf32, #tpu.memory_space<vmem>>, vector<8x176xf32>,
    return
  }
  func.func @transform_0(%arg0: i32) -> (i32, i32) {
    %c0_i32 = arith.constant 0 : i32
    %c0_i32_0 = arith.constant 0 : i32
    return %arg0, %c0_i32 : i32, i32
  }
  func.func @transform_1(%arg0: i32) -> (i32, i32) {
    %c0_i32 = arith.constant 0 : i32
    %c0_i32_0 = arith.constant 0 : i32
    return %arg0, %c0_i32 : i32, i32
  }
}

</mosaic_0001>

<llo_original>
// kernel: tpu_custom_call.1
$region0: #{tpu_custom_call.1}
  #allocation0 [shape = 'u32[]', space=smem, size = 0x4, offset = 0x4, fixed_abs, tag = 'smem constant byte address 0x4 - core index']
  #allocation1 [shape = 'u32[72,128]{1,0:T(1,128)}', space=vmem, size = 0x9000, scoped, tag = 'internal scratch']
  %s0 = inlined_call_operand.hbm [shape: f32[8,16], index: 0, kind: input, shape index: {}]
  %s1 = inlined_call_operand.hbm [shape: f32[8,176], index: 1, kind: output, shape index: {}]
  %s2 = sld [smem:[#allocation0]]
  $region18: #{tpu_custom_call.1} parent=0
    _
  %s4 = ssub.s32 1, %s2
  %s5 = scalar_select 0, %s4, %s2
  $region1: #{tpu_custom_call.1} parent=0
    #allocation2 [shape = 'u8[4096]{0}', space=vmem, size = 0x1000, scoped, tag = 'input window, operand 0, single buffered']
    #allocation3 [shape = 's32[1]{0}', space=sflag, size = 0x4, scoped, tag = 'scoped memory for tpu_custom_call.1']
    #allocation4 [shape = 's32[1]{0}', space=sflag, size = 0x4, scoped, tag = 'scoped memory for tpu_custom_call.1']
    #allocation5 [shape = 'u8[8192]{0}', space=vmem, size = 0x2000, scoped, tag = 'output window, operand 0, single buffered']
    %6 = vsyncpa [#allocation3], 0
    %7 = vsyncpa [#allocation4], 0
    // Predicated region
    $region2: #{tpu_custom_call.1} parent=1 // pred_check
      _
    $region3: #{tpu_custom_call.1} parent=1 // pred_check_branch
      %9 = sbr.rel (0) target = $region5
    $region4: #{tpu_custom_call.1} parent=1 // pred_region
      %11 = vsyncadd [#allocation3], 0
      %s13 = sshll.u32 %s0, 4
      %s14 = int_to_ptr.hbm [resolvable:$true] %s13
      %s15 = sshll.u32 [#allocation2], 4
      %s16 = int_to_ptr.vmem [resolvable:$true] %s15
      %18 = dma.hbm_to_vmem [thread:$0]  %s14, 128, %s16, [#allocation3]
    $region5: #{tpu_custom_call.1} parent=1 // pred_fallthru
      _
    // Predicated region
    $region6: #{tpu_custom_call.1} parent=1 // pred_check
      _
    $region7: #{tpu_custom_call.1} parent=1 // pred_check_branch
      %20 = sbr.rel (0) target = $region9
    $region8: #{tpu_custom_call.1} parent=1 // pred_region
      %22 = dma.done [#allocation3], 128
    $region9: #{tpu_custom_call.1} parent=1 // pred_fallthru
      _
    %v23 = vld [vmem:[#allocation2] sm:$0xff]
    %v24 = vmul.f32 %v23, 3.1415927
    %v25 = vand.u32 2147483647, %v24
    %vm26 = vcmp.le.f32.partialorder %v25, 0.7853982
    %vm27 = vcmp.lt.s32.totalorder %v24, 0
    %v28 = vand.u32 %v24, 2139095040
    %v29 = vshrl.u32 %v28, 23
    %v30 = vsub.s32 %v29, 127
    %v31 = vand.u32 2147483647, %v24
    %v32 = vand.u32 %v31, 8388607
    %v33 = vor.u32 %v32, 8388608
    %v34 = vsub.s32 0, %v33
    %v35 = vadd.s32 %v30, 1
    %vm36 = vcmp.gt.s32.totalorder %v35, 0
    %v37 = vsel %vm36, %v35, 0
    %v38 = vshrl.u32 %v37, 5
    %v39 = vand.u32 %v37, 31
    %v40 = vsub.s32 32, %v39
    %v41 = vshrl.u32 683565275, %v40
    %v42 = vshll.u32 683565275, %v39
    %v43 = vshrl.u32 2475754826, %v40
    %v44 = vor.u32 %v42, %v43
    %v45 = vshll.u32 2475754826, %v39
    %v46 = vshrl.u32 2131351028, %v40
    %v47 = vor.u32 %v45, %v46
    %v48 = vshll.u32 2131351028, %v39
    %v49 = vshrl.u32 2102212464, %v40
    %v50 = vor.u32 %v48, %v49
    %v51 = vshll.u32 2102212464, %v39
    %v52 = vshrl.u32 920167782, %v40
    %v53 = vor.u32 %v51, %v52
    %v54 = vshll.u32 920167782, %v39
    %v55 = vshrl.u32 1326507024, %v40
    %v56 = vor.u32 %v54, %v55
    %vm57 = vcmp.lt.s32.totalorder %v38, 1
    %vm58 = vcmp.lt.s32.totalorder %v38, 2
    %vm59 = vcmp.lt.s32.totalorder %v38, 3
    %vm60 = vcmp.lt.s32.totalorder %v38, 4
    %v61 = vsel %vm57, %v41, %v44
    %v62 = vsel %vm60, %v50, 2102212464
    %v63 = vsel %vm59, %v47, %v62
    %v64 = vsel %vm58, %v61, %v63
    %v65 = vsel %vm57, %v44, %v47
    %v66 = vsel %vm60, %v53, 920167782
    %v67 = vsel %vm59, %v50, %v66
    %v68 = vsel %vm58, %v65, %v67
    %v69 = vsel %vm57, %v47, %v50
    %v70 = vsel %vm60, %v56, 1326507024
    %v71 = vsel %vm59, %v53, %v70
    %v72 = vsel %vm58, %v69, %v71
    %v73 = vshll.u32 %v33, 8
    %v74 = vand.u32 %v73, 65535
    %v75 = vshrl.u32 %v73, 16
    %v76 = vand.u32 %v72, 65535
    %v77 = vshrl.u32 %v72, 16
    %v78 = vmul.u32 %v74, %v76
    %v79 = vmul.u32 %v74, %v77
    %v80 = vmul.u32 %v75, %v76
    %v81 = vmul.u32 %v75, %v77
    %v82 = vshll.u32 %v79, 16
    %v83 = vshrl.u32 %v79, 16
    %v84 = vshll.u32 %v80, 16
    %v85 = vshrl.u32 %v80, 16
    %vm86 = vc.u32 %v78, %v82
    %v87 = vsel %vm86, 1, 0
    %v88 = vadd.s32 %v78, %v82
    %v89 = vadd.s32 %v81, %v87
    %vm90 = vc.u32 %v88, %v84
    %v91 = vsel %vm90, 1, 0
    %v92 = vadd.s32 %v88, %v84
    %v93 = vadd.s32 %v89, %v91
    %v94 = vadd.s32 %v93, %v83
    %v95 = vadd.s32 %v94, %v85
    %v96 = vand.u32 %v73, 65535
    %v97 = vshrl.u32 %v73, 16
    %v98 = vand.u32 %v68, 65535
    %v99 = vshrl.u32 %v68, 16
    %v100 = vmul.u32 %v96, %v98
    %v101 = vmul.u32 %v96, %v99
    %v102 = vmul.u32 %v97, %v98
    %v103 = vmul.u32 %v97, %v99
    %v104 = vshll.u32 %v101, 16
    %v105 = vshrl.u32 %v101, 16
    %v106 = vshll.u32 %v102, 16
    %v107 = vshrl.u32 %v102, 16
    %vm108 = vc.u32 %v100, %v104
    %v109 = vsel %vm108, 1, 0
    %v110 = vadd.s32 %v100, %v104
    %v111 = vadd.s32 %v103, %v109
    %vm112 = vc.u32 %v110, %v106
    %v113 = vsel %vm112, 1, 0
    %v114 = vadd.s32 %v110, %v106
    %v115 = vadd.s32 %v111, %v113
    %v116 = vadd.s32 %v115, %v105
    %v117 = vadd.s32 %v116, %v107
    %v118 = vmul.u32 %v73, %v64
    %v119 = vadd.s32 %v95, %v114
    %vm120 = vc.u32 %v95, %v114
    %v121 = vadd.s32 %v117, 1
    %v122 = vsel %vm120, %v121, %v117
    %v123 = vadd.s32 %v118, %v122
    %v124 = vadd.s32 %v123, 536870912
    %v125 = vshrl.u32 %v124, 30
    %v126 = vshll.u32 %v125, 30
    %v127 = vsub.s32 %v123, %v126
    %vm128 = vcmp.lt.s32.totalorder %v127, 0
    %v129 = vsub.s32 0, %v127
    %v130 = vsel %vm128, %v129, %v127
    %v131 = vclz %v130
    %v132 = vsub.s32 %v131, 2
    %vm133 = vcmp.gt.s32.totalorder 0, %v132
    %v134 = vsel %vm133, 0, %v132
    %v135 = vsub.s32 32, %v134
    %v136 = vshll.u32 %v127, %v134
    %v137 = vshrl.u32 %v119, %v135
    %v138 = vor.u32 %v136, %v137
    %v139 = vsub.s32 4294967266, %v134
    %v140 = vadd.s32 %v139, 127
    %v141 = vshll.u32 %v140, 23
    %v142 = vor.u32 4788187, %v141
    %v143 = vand.u32 2147483647, %v142
    %v145 = vcvt.s32.f32 %v138
    %v146 = vmul.f32 %v145, %v143
    %v147 = vxor.u32 %v146, 2147483648
    %v148 = vsel %vm27, %v147, %v146
    %v149 = vsub.s32 4, %v125
    %v150 = vsel %vm27, %v149, %v125
    %v151 = vsel %vm26, %v24, %v148
    %v152 = vsel %vm26, 0, %v150
    %v153 = vmul.f32 %v151, %v151
    %v154 = vmul.f32 %v153, -0.001358992
    %v155 = vadd.f32 %v154, 0.041655596
    %v156 = vmul.f32 %v153, %v155
    %v157 = vadd.f32 %v156, -0.4999988
    %v158 = vmul.f32 %v153, %v157
    %v159 = vadd.f32 1.0, %v158
    %v160 = vmul.f32 %v151, %v151
    %v161 = vmul.f32 %v160, -0.00019511016
    %v162 = vadd.f32 %v161, 0.008332121
    %v163 = vmul.f32 %v160, %v162
    %v164 = vadd.f32 %v163, -0.16666654
    %v165 = vmul.f32 %v160, %v164
    %v166 = vadd.f32 %v165, 1.0
    %v167 = vmul.f32 %v166, %v151
    %vm168 = vweird.f32 %v24
    %v169 = vadd.s32 %v152, 3
    %v170 = vand.u32 %v169, 3
    %vm171 = vcmp.lt.s32.totalorder %v170, 2
    %vm172 = vcmp.eq.s32.totalorder %v170, 0
    %v173 = vxor.u32 %v167, 2147483648
    %v174 = vsel %vm172, %v159, %v173
    %vm175 = vcmp.eq.s32.totalorder %v170, 2
    %v176 = vxor.u32 %v159, 2147483648
    %v177 = vsel %vm175, %v176, %v167
    %v178 = vsel %vm171, %v174, %v177
    %v179 = vsel %vm168, nan, %v178
    %v180 = vand.u32 2147483647, %v24
    %vm181 = vcmp.le.f32.partialorder %v180, 0.7853982
    %vm182 = vcmp.lt.s32.totalorder %v24, 0
    %v183 = vand.u32 %v24, 2139095040
    %v184 = vshrl.u32 %v183, 23
    %v185 = vsub.s32 %v184, 127
    %v186 = vand.u32 2147483647, %v24
    %v187 = vand.u32 %v186, 8388607
    %v188 = vor.u32 %v187, 8388608
    %v189 = vsub.s32 0, %v188
    %v190 = vadd.s32 %v185, 1
    %vm191 = vcmp.gt.s32.totalorder %v190, 0
    %v192 = vsel %vm191, %v190, 0
    %v193 = vshrl.u32 %v192, 5
    %v194 = vand.u32 %v192, 31
    %v195 = vsub.s32 32, %v194
    %v196 = vshrl.u32 683565275, %v195
    %v197 = vshll.u32 683565275, %v194
    %v198 = vshrl.u32 2475754826, %v195
    %v199 = vor.u32 %v197, %v198
    %v200 = vshll.u32 2475754826, %v194
    %v201 = vshrl.u32 2131351028, %v195
    %v202 = vor.u32 %v200, %v201
    %v203 = vshll.u32 2131351028, %v194
    %v204 = vshrl.u32 2102212464, %v195
    %v205 = vor.u32 %v203, %v204
    %v206 = vshll.u32 2102212464, %v194
    %v207 = vshrl.u32 920167782, %v195
    %v208 = vor.u32 %v206, %v207
    %v209 = vshll.u32 920167782, %v194
    %v210 = vshrl.u32 1326507024, %v195
    %v211 = vor.u32 %v209, %v210
    %vm212 = vcmp.lt.s32.totalorder %v193, 1
    %vm213 = vcmp.lt.s32.totalorder %v193, 2
    %vm214 = vcmp.lt.s32.totalorder %v193, 3
    %vm215 = vcmp.lt.s32.totalorder %v193, 4
    %v216 = vsel %vm212, %v196, %v199
    %v217 = vsel %vm215, %v205, 2102212464
    %v218 = vsel %vm214, %v202, %v217
    %v219 = vsel %vm213, %v216, %v218
    %v220 = vsel %vm212, %v199, %v202
    %v221 = vsel %vm215, %v208, 920167782
    %v222 = vsel %vm214, %v205, %v221
    %v223 = vsel %vm213, %v220, %v222
    %v224 = vsel %vm212, %v202, %v205
    %v225 = vsel %vm215, %v211, 1326507024
    %v226 = vsel %vm214, %v208, %v225
    %v227 = vsel %vm213, %v224, %v226
    %v228 = vshll.u32 %v188, 8
    %v229 = vand.u32 %v228, 65535
    %v230 = vshrl.u32 %v228, 16
    %v231 = vand.u32 %v227, 65535
    %v232 = vshrl.u32 %v227, 16
    %v233 = vmul.u32 %v229, %v231
    %v234 = vmul.u32 %v229, %v232
    %v235 = vmul.u32 %v230, %v231
    %v236 = vmul.u32 %v230, %v232
    %v237 = vshll.u32 %v234, 16
    %v238 = vshrl.u32 %v234, 16
    %v239 = vshll.u32 %v235, 16
    %v240 = vshrl.u32 %v235, 16
    %vm241 = vc.u32 %v233, %v237
    %v242 = vsel %vm241, 1, 0
    %v243 = vadd.s32 %v233, %v237
    %v244 = vadd.s32 %v236, %v242
    %vm245 = vc.u32 %v243, %v239
    %v246 = vsel %vm245, 1, 0
    %v247 = vadd.s32 %v243, %v239
    %v248 = vadd.s32 %v244, %v246
    %v249 = vadd.s32 %v248, %v238
    %v250 = vadd.s32 %v249, %v240
    %v251 = vand.u32 %v228, 65535
    %v252 = vshrl.u32 %v228, 16
    %v253 = vand.u32 %v223, 65535
    %v254 = vshrl.u32 %v223, 16
    %v255 = vmul.u32 %v251, %v253
    %v256 = vmul.u32 %v251, %v254
    %v257 = vmul.u32 %v252, %v253
    %v258 = vmul.u32 %v252, %v254
    %v259 = vshll.u32 %v256, 16
    %v260 = vshrl.u32 %v256, 16
    %v261 = vshll.u32 %v257, 16
    %v262 = vshrl.u32 %v257, 16
    %vm263 = vc.u32 %v255, %v259
    %v264 = vsel %vm263, 1, 0
    %v265 = vadd.s32 %v255, %v259
    %v266 = vadd.s32 %v258, %v264
    %vm267 = vc.u32 %v265, %v261
    %v268 = vsel %vm267, 1, 0
    %v269 = vadd.s32 %v265, %v261
    %v270 = vadd.s32 %v266, %v268
    %v271 = vadd.s32 %v270, %v260
    %v272 = vadd.s32 %v271, %v262
    %v273 = vmul.u32 %v228, %v219
    %v274 = vadd.s32 %v250, %v269
    %vm275 = vc.u32 %v250, %v269
    %v276 = vadd.s32 %v272, 1
    %v277 = vsel %vm275, %v276, %v272
    %v278 = vadd.s32 %v273, %v277
    %v279 = vadd.s32 %v278, 536870912
    %v280 = vshrl.u32 %v279, 30
    %v281 = vshll.u32 %v280, 30
    %v282 = vsub.s32 %v278, %v281
    %vm283 = vcmp.lt.s32.totalorder %v282, 0
    %v284 = vsub.s32 0, %v282
    %v285 = vsel %vm283, %v284, %v282
    %v286 = vclz %v285
    %v287 = vsub.s32 %v286, 2
    %vm288 = vcmp.gt.s32.totalorder 0, %v287
    %v289 = vsel %vm288, 0, %v287
    %v290 = vsub.s32 32, %v289
    %v291 = vshll.u32 %v282, %v289
    %v292 = vshrl.u32 %v274, %v290
    %v293 = vor.u32 %v291, %v292
    %v294 = vsub.s32 4294967266, %v289
    %v295 = vadd.s32 %v294, 127
    %v296 = vshll.u32 %v295, 23
    %v297 = vor.u32 4788187, %v296
    %v298 = vand.u32 2147483647, %v297
    %v300 = vcvt.s32.f32 %v293
    %v301 = vmul.f32 %v300, %v298
    %v302 = vxor.u32 %v301, 2147483648
    %v303 = vsel %vm182, %v302, %v301
    %v304 = vsub.s32 4, %v280
    %v305 = vsel %vm182, %v304, %v280
    %v306 = vsel %vm181, %v24, %v303
    %v307 = vsel %vm181, 0, %v305
    %v308 = vmul.f32 %v306, %v306
    %v309 = vmul.f32 %v308, -0.001358992
    %v310 = vadd.f32 %v309, 0.041655596
    %v311 = vmul.f32 %v308, %v310
    %v312 = vadd.f32 %v311, -0.4999988
    %v313 = vmul.f32 %v308, %v312
    %v314 = vadd.f32 1.0, %v313
    %v315 = vmul.f32 %v306, %v306
    %v316 = vmul.f32 %v315, -0.00019511016
    %v317 = vadd.f32 %v316, 0.008332121
    %v318 = vmul.f32 %v315, %v317
    %v319 = vadd.f32 %v318, -0.16666654
    %v320 = vmul.f32 %v315, %v319
    %v321 = vadd.f32 %v320, 1.0
    %v322 = vmul.f32 %v321, %v306
    %vm323 = vweird.f32 %v24
    %v324 = vand.u32 %v307, 3
    %vm325 = vcmp.lt.s32.totalorder %v324, 2
    %vm326 = vcmp.eq.s32.totalorder %v324, 0
    %v327 = vxor.u32 %v322, 2147483648
    %v328 = vsel %vm326, %v314, %v327
    %vm329 = vcmp.eq.s32.totalorder %v324, 2
    %v330 = vxor.u32 %v314, 2147483648
    %v331 = vsel %vm329, %v330, %v322
    %v332 = vsel %vm325, %v328, %v331
    %v333 = vsel %vm323, nan, %v332
    %v334 = vmul.f32 %v23, 6.2831855
    %v335 = vand.u32 2147483647, %v334
    %vm336 = vcmp.le.f32.partialorder %v335, 0.7853982
    %vm337 = vcmp.lt.s32.totalorder %v334, 0
    %v338 = vand.u32 %v334, 2139095040
    %v339 = vshrl.u32 %v338, 23
    %v340 = vsub.s32 %v339, 127
    %v341 = vand.u32 2147483647, %v334
    %v342 = vand.u32 %v341, 8388607
    %v343 = vor.u32 %v342, 8388608
    %v344 = vsub.s32 0, %v343
    %v345 = vadd.s32 %v340, 1
    %vm346 = vcmp.gt.s32.totalorder %v345, 0
    %v347 = vsel %vm346, %v345, 0
    %v348 = vshrl.u32 %v347, 5
    %v349 = vand.u32 %v347, 31
    %v350 = vsub.s32 32, %v349
    %v351 = vshrl.u32 683565275, %v350
    %v352 = vshll.u32 683565275, %v349
    %v353 = vshrl.u32 2475754826, %v350
    %v354 = vor.u32 %v352, %v353
    %v355 = vshll.u32 2475754826, %v349
    %v356 = vshrl.u32 2131351028, %v350
    %v357 = vor.u32 %v355, %v356
    %v358 = vshll.u32 2131351028, %v349
    %v359 = vshrl.u32 2102212464, %v350
    %v360 = vor.u32 %v358, %v359
    %v361 = vshll.u32 2102212464, %v349
    %v362 = vshrl.u32 920167782, %v350
    %v363 = vor.u32 %v361, %v362
    %v364 = vshll.u32 920167782, %v349
    %v365 = vshrl.u32 1326507024, %v350
    %v366 = vor.u32 %v364, %v365
    %vm367 = vcmp.lt.s32.totalorder %v348, 1
    %vm368 = vcmp.lt.s32.totalorder %v348, 2
    %vm369 = vcmp.lt.s32.totalorder %v348, 3
    %vm370 = vcmp.lt.s32.totalorder %v348, 4
    %v371 = vsel %vm367, %v351, %v354
    %v372 = vsel %vm370, %v360, 2102212464
    %v373 = vsel %vm369, %v357, %v372
    %v374 = vsel %vm368, %v371, %v373
    %v375 = vsel %vm367, %v354, %v357
    %v376 = vsel %vm370, %v363, 920167782
    %v377 = vsel %vm369, %v360, %v376
    %v378 = vsel %vm368, %v375, %v377
    %v379 = vsel %vm367, %v357, %v360
    %v380 = vsel %vm370, %v366, 1326507024
    %v381 = vsel %vm369, %v363, %v380
    %v382 = vsel %vm368, %v379, %v381
    %v383 = vshll.u32 %v343, 8
    %v384 = vand.u32 %v383, 65535
    %v385 = vshrl.u32 %v383, 16
    %v386 = vand.u32 %v382, 65535
    %v387 = vshrl.u32 %v382, 16
    %v388 = vmul.u32 %v384, %v386
    %v389 = vmul.u32 %v384, %v387
    %v390 = vmul.u32 %v385, %v386
    %v391 = vmul.u32 %v385, %v387
    %v392 = vshll.u32 %v389, 16
    %v393 = vshrl.u32 %v389, 16
    %v394 = vshll.u32 %v390, 16
    %v395 = vshrl.u32 %v390, 16
    %vm396 = vc.u32 %v388, %v392
    %v397 = vsel %vm396, 1, 0
    %v398 = vadd.s32 %v388, %v392
    %v399 = vadd.s32 %v391, %v397
    %vm400 = vc.u32 %v398, %v394
    %v401 = vsel %vm400, 1, 0
    %v402 = vadd.s32 %v398, %v394
    %v403 = vadd.s32 %v399, %v401
    %v404 = vadd.s32 %v403, %v393
    %v405 = vadd.s32 %v404, %v395
    %v406 = vand.u32 %v383, 65535
    %v407 = vshrl.u32 %v383, 16
    %v408 = vand.u32 %v378, 65535
    %v409 = vshrl.u32 %v378, 16
    %v410 = vmul.u32 %v406, %v408
    %v411 = vmul.u32 %v406, %v409
    %v412 = vmul.u32 %v407, %v408
    %v413 = vmul.u32 %v407, %v409
    %v414 = vshll.u32 %v411, 16
    %v415 = vshrl.u32 %v411, 16
    %v416 = vshll.u32 %v412, 16
    %v417 = vshrl.u32 %v412, 16
    %vm418 = vc.u32 %v410, %v414
    %v419 = vsel %vm418, 1, 0
    %v420 = vadd.s32 %v410, %v414
    %v421 = vadd.s32 %v413, %v419
    %vm422 = vc.u32 %v420, %v416
    %v423 = vsel %vm422, 1, 0
    %v424 = vadd.s32 %v420, %v416
    %v425 = vadd.s32 %v421, %v423
    %v426 = vadd.s32 %v425, %v415
    %v427 = vadd.s32 %v426, %v417
    %v428 = vmul.u32 %v383, %v374
    %v429 = vadd.s32 %v405, %v424
    %vm430 = vc.u32 %v405, %v424
    %v431 = vadd.s32 %v427, 1
    %v432 = vsel %vm430, %v431, %v427
    %v433 = vadd.s32 %v428, %v432
    %v434 = vadd.s32 %v433, 536870912
    %v435 = vshrl.u32 %v434, 30
    %v436 = vshll.u32 %v435, 30
    %v437 = vsub.s32 %v433, %v436
    %vm438 = vcmp.lt.s32.totalorder %v437, 0
    %v439 = vsub.s32 0, %v437
    %v440 = vsel %vm438, %v439, %v437
    %v441 = vclz %v440
    %v442 = vsub.s32 %v441, 2
    %vm443 = vcmp.gt.s32.totalorder 0, %v442
    %v444 = vsel %vm443, 0, %v442
    %v445 = vsub.s32 32, %v444
    %v446 = vshll.u32 %v437, %v444
    %v447 = vshrl.u32 %v429, %v445
    %v448 = vor.u32 %v446, %v447
    %v449 = vsub.s32 4294967266, %v444
    %v450 = vadd.s32 %v449, 127
    %v451 = vshll.u32 %v450, 23
    %v452 = vor.u32 4788187, %v451
    %v453 = vand.u32 2147483647, %v452
    %v455 = vcvt.s32.f32 %v448
    %v456 = vmul.f32 %v455, %v453
    %v457 = vxor.u32 %v456, 2147483648
    %v458 = vsel %vm337, %v457, %v456
    %v459 = vsub.s32 4, %v435
    %v460 = vsel %vm337, %v459, %v435
    %v461 = vsel %vm336, %v334, %v458
    %v462 = vsel %vm336, 0, %v460
    %v463 = vmul.f32 %v461, %v461
    %v464 = vmul.f32 %v463, -0.001358992
    %v465 = vadd.f32 %v464, 0.041655596
    %v466 = vmul.f32 %v463, %v465
    %v467 = vadd.f32 %v466, -0.4999988
    %v468 = vmul.f32 %v463, %v467
    %v469 = vadd.f32 1.0, %v468
    %v470 = vmul.f32 %v461, %v461
    %v471 = vmul.f32 %v470, -0.00019511016
    %v472 = vadd.f32 %v471, 0.008332121
    %v473 = vmul.f32 %v470, %v472
    %v474 = vadd.f32 %v473, -0.16666654
    %v475 = vmul.f32 %v470, %v474
    %v476 = vadd.f32 %v475, 1.0
    %v477 = vmul.f32 %v476, %v461
    %vm478 = vweird.f32 %v334
    %v479 = vadd.s32 %v462, 3
    %v480 = vand.u32 %v479, 3
    %vm481 = vcmp.lt.s32.totalorder %v480, 2
    %vm482 = vcmp.eq.s32.totalorder %v480, 0
    %v483 = vxor.u32 %v477, 2147483648
    %v484 = vsel %vm482, %v469, %v483
    %vm485 = vcmp.eq.s32.totalorder %v480, 2
    %v486 = vxor.u32 %v469, 2147483648
    %v487 = vsel %vm485, %v486, %v477
    %v488 = vsel %vm481, %v484, %v487
    %v489 = vsel %vm478, nan, %v488
    %v490 = vand.u32 2147483647, %v334
    %vm491 = vcmp.le.f32.partialorder %v490, 0.7853982
    %vm492 = vcmp.lt.s32.totalorder %v334, 0
    %v493 = vand.u32 %v334, 2139095040
    %v494 = vshrl.u32 %v493, 23
    %v495 = vsub.s32 %v494, 127
    %v496 = vand.u32 2147483647, %v334
    %v497 = vand.u32 %v496, 8388607
    %v498 = vor.u32 %v497, 8388608
    %v499 = vsub.s32 0, %v498
    %v500 = vadd.s32 %v495, 1
    %vm501 = vcmp.gt.s32.totalorder %v500, 0
    %v502 = vsel %vm501, %v500, 0
    %v503 = vshrl.u32 %v502, 5
    %v504 = vand.u32 %v502, 31
    %v505 = vsub.s32 32, %v504
    %v506 = vshrl.u32 683565275, %v505
    %v507 = vshll.u32 683565275, %v504
    %v508 = vshrl.u32 2475754826, %v505
    %v509 = vor.u32 %v507, %v508
    %v510 = vshll.u32 2475754826, %v504
    %v511 = vshrl.u32 2131351028, %v505
    %v512 = vor.u32 %v510, %v511
    %v513 = vshll.u32 2131351028, %v504
    %v514 = vshrl.u32 2102212464, %v505
    %v515 = vor.u32 %v513, %v514
    %v516 = vshll.u32 2102212464, %v504
    %v517 = vshrl.u32 920167782, %v505
    %v518 = vor.u32 %v516, %v517
    %v519 = vshll.u32 920167782, %v504
    %v520 = vshrl.u32 1326507024, %v505
    %v521 = vor.u32 %v519, %v520
    %vm522 = vcmp.lt.s32.totalorder %v503, 1
    %vm523 = vcmp.lt.s32.totalorder %v503, 2
    %vm524 = vcmp.lt.s32.totalorder %v503, 3
    %vm525 = vcmp.lt.s32.totalorder %v503, 4
    %v526 = vsel %vm522, %v506, %v509
    %v527 = vsel %vm525, %v515, 2102212464
    %v528 = vsel %vm524, %v512, %v527
    %v529 = vsel %vm523, %v526, %v528
    %v530 = vsel %vm522, %v509, %v512
    %v531 = vsel %vm525, %v518, 920167782
    %v532 = vsel %vm524, %v515, %v531
    %v533 = vsel %vm523, %v530, %v532
    %v534 = vsel %vm522, %v512, %v515
    %v535 = vsel %vm525, %v521, 1326507024
    %v536 = vsel %vm524, %v518, %v535
    %v537 = vsel %vm523, %v534, %v536
    %v538 = vshll.u32 %v498, 8
    %v539 = vand.u32 %v538, 65535
    %v540 = vshrl.u32 %v538, 16
    %v541 = vand.u32 %v537, 65535
    %v542 = vshrl.u32 %v537, 16
    %v543 = vmul.u32 %v539, %v541
    %v544 = vmul.u32 %v539, %v542
    %v545 = vmul.u32 %v540, %v541
    %v546 = vmul.u32 %v540, %v542
    %v547 = vshll.u32 %v544, 16
    %v548 = vshrl.u32 %v544, 16
    %v549 = vshll.u32 %v545, 16
    %v550 = vshrl.u32 %v545, 16
    %vm551 = vc.u32 %v543, %v547
    %v552 = vsel %vm551, 1, 0
    %v553 = vadd.s32 %v543, %v547
    %v554 = vadd.s32 %v546, %v552
    %vm555 = vc.u32 %v553, %v549
    %v556 = vsel %vm555, 1, 0
    %v557 = vadd.s32 %v553, %v549
    %v558 = vadd.s32 %v554, %v556
    %v559 = vadd.s32 %v558, %v548
    %v560 = vadd.s32 %v559, %v550
    %v561 = vand.u32 %v538, 65535
    %v562 = vshrl.u32 %v538, 16
    %v563 = vand.u32 %v533, 65535
    %v564 = vshrl.u32 %v533, 16
    %v565 = vmul.u32 %v561, %v563
    %v566 = vmul.u32 %v561, %v564
    %v567 = vmul.u32 %v562, %v563
    %v568 = vmul.u32 %v562, %v564
    %v569 = vshll.u32 %v566, 16
    %v570 = vshrl.u32 %v566, 16
    %v571 = vshll.u32 %v567, 16
    %v572 = vshrl.u32 %v567, 16
    %vm573 = vc.u32 %v565, %v569
    %v574 = vsel %vm573, 1, 0
    %v575 = vadd.s32 %v565, %v569
    %v576 = vadd.s32 %v568, %v574
    %vm577 = vc.u32 %v575, %v571
    %v578 = vsel %vm577, 1, 0
    %v579 = vadd.s32 %v575, %v571
    %v580 = vadd.s32 %v576, %v578
    %v581 = vadd.s32 %v580, %v570
    %v582 = vadd.s32 %v581, %v572
    %v583 = vmul.u32 %v538, %v529
    %v584 = vadd.s32 %v560, %v579
    %vm585 = vc.u32 %v560, %v579
    %v586 = vadd.s32 %v582, 1
    %v587 = vsel %vm585, %v586, %v582
    %v588 = vadd.s32 %v583, %v587
    %v589 = vadd.s32 %v588, 536870912
    %v590 = vshrl.u32 %v589, 30
    %v591 = vshll.u32 %v590, 30
    %v592 = vsub.s32 %v588, %v591
    %vm593 = vcmp.lt.s32.totalorder %v592, 0
    %v594 = vsub.s32 0, %v592
    %v595 = vsel %vm593, %v594, %v592
    %v596 = vclz %v595
    %v597 = vsub.s32 %v596, 2
    %vm598 = vcmp.gt.s32.totalorder 0, %v597
    %v599 = vsel %vm598, 0, %v597
    %v600 = vsub.s32 32, %v599
    %v601 = vshll.u32 %v592, %v599
    %v602 = vshrl.u32 %v584, %v600
    %v603 = vor.u32 %v601, %v602
    %v604 = vsub.s32 4294967266, %v599
    %v605 = vadd.s32 %v604, 127
    %v606 = vshll.u32 %v605, 23
    %v607 = vor.u32 4788187, %v606
    %v608 = vand.u32 2147483647, %v607
    %v610 = vcvt.s32.f32 %v603
    %v611 = vmul.f32 %v610, %v608
    %v612 = vxor.u32 %v611, 2147483648
    %v613 = vsel %vm492, %v612, %v611
    %v614 = vsub.s32 4, %v590
    %v615 = vsel %vm492, %v614, %v590
    %v616 = vsel %vm491, %v334, %v613
    %v617 = vsel %vm491, 0, %v615
    %v618 = vmul.f32 %v616, %v616
    %v619 = vmul.f32 %v618, -0.001358992
    %v620 = vadd.f32 %v619, 0.041655596
    %v621 = vmul.f32 %v618, %v620
    %v622 = vadd.f32 %v621, -0.4999988
    %v623 = vmul.f32 %v618, %v622
    %v624 = vadd.f32 1.0, %v623
    %v625 = vmul.f32 %v616, %v616
    %v626 = vmul.f32 %v625, -0.00019511016
    %v627 = vadd.f32 %v626, 0.008332121
    %v628 = vmul.f32 %v625, %v627
    %v629 = vadd.f32 %v628, -0.16666654
    %v630 = vmul.f32 %v625, %v629
    %v631 = vadd.f32 %v630, 1.0
    %v632 = vmul.f32 %v631, %v616
    %vm633 = vweird.f32 %v334
    %v634 = vand.u32 %v617, 3
    %vm635 = vcmp.lt.s32.totalorder %v634, 2
    %vm636 = vcmp.eq.s32.totalorder %v634, 0
    %v637 = vxor.u32 %v632, 2147483648
    %v638 = vsel %vm636, %v624, %v637
    %vm639 = vcmp.eq.s32.totalorder %v634, 2
    %v640 = vxor.u32 %v624, 2147483648
    %v641 = vsel %vm639, %v640, %v632
    %v642 = vsel %vm635, %v638, %v641
    %v643 = vsel %vm633, nan, %v642
    %v644 = vmul.f32 %v23, 12.566371
    %v645 = vand.u32 2147483647, %v644
    %vm646 = vcmp.le.f32.partialorder %v645, 0.7853982
    %vm647 = vcmp.lt.s32.totalorder %v644, 0
    %v648 = vand.u32 %v644, 2139095040
    %v649 = vshrl.u32 %v648, 23
    %v650 = vsub.s32 %v649, 127
    %v651 = vand.u32 2147483647, %v644
    %v652 = vand.u32 %v651, 8388607
    %v653 = vor.u32 %v652, 8388608
    %v654 = vsub.s32 0, %v653
    %v655 = vadd.s32 %v650, 1
    %vm656 = vcmp.gt.s32.totalorder %v655, 0
    %v657 = vsel %vm656, %v655, 0
    %v658 = vshrl.u32 %v657, 5
    %v659 = vand.u32 %v657, 31
    %v660 = vsub.s32 32, %v659
    %v661 = vshrl.u32 683565275, %v660
    %v662 = vshll.u32 683565275, %v659
    %v663 = vshrl.u32 2475754826, %v660
    %v664 = vor.u32 %v662, %v663
    %v665 = vshll.u32 2475754826, %v659
    %v666 = vshrl.u32 2131351028, %v660
    %v667 = vor.u32 %v665, %v666
    %v668 = vshll.u32 2131351028, %v659
    %v669 = vshrl.u32 2102212464, %v660
    %v670 = vor.u32 %v668, %v669
    %v671 = vshll.u32 2102212464, %v659
    %v672 = vshrl.u32 920167782, %v660
    %v673 = vor.u32 %v671, %v672
    %v674 = vshll.u32 920167782, %v659
    %v675 = vshrl.u32 1326507024, %v660
    %v676 = vor.u32 %v674, %v675
    %vm677 = vcmp.lt.s32.totalorder %v658, 1
    %vm678 = vcmp.lt.s32.totalorder %v658, 2
    %vm679 = vcmp.lt.s32.totalorder %v658, 3
    %vm680 = vcmp.lt.s32.totalorder %v658, 4
    %v681 = vsel %vm677, %v661, %v664
    %v682 = vsel %vm680, %v670, 2102212464
    %v683 = vsel %vm679, %v667, %v682
    %v684 = vsel %vm678, %v681, %v683
    %v685 = vsel %vm677, %v664, %v667
    %v686 = vsel %vm680, %v673, 920167782
    %v687 = vsel %vm679, %v670, %v686
    %v688 = vsel %vm678, %v685, %v687
    %v689 = vsel %vm677, %v667, %v670
    %v690 = vsel %vm680, %v676, 1326507024
    %v691 = vsel %vm679, %v673, %v690
    %v692 = vsel %vm678, %v689, %v691
    %v693 = vshll.u32 %v653, 8
    %v694 = vand.u32 %v693, 65535
    %v695 = vshrl.u32 %v693, 16
    %v696 = vand.u32 %v692, 65535
    %v697 = vshrl.u32 %v692, 16
    %v698 = vmul.u32 %v694, %v696
    %v699 = vmul.u32 %v694, %v697
    %v700 = vmul.u32 %v695, %v696
    %v701 = vmul.u32 %v695, %v697
    %v702 = vshll.u32 %v699, 16
    %v703 = vshrl.u32 %v699, 16
    %v704 = vshll.u32 %v700, 16
    %v705 = vshrl.u32 %v700, 16
    %vm706 = vc.u32 %v698, %v702
    %v707 = vsel %vm706, 1, 0
    %v708 = vadd.s32 %v698, %v702
    %v709 = vadd.s32 %v701, %v707
    %vm710 = vc.u32 %v708, %v704
    %v711 = vsel %vm710, 1, 0
    %v712 = vadd.s32 %v708, %v704
    %v713 = vadd.s32 %v709, %v711
    %v714 = vadd.s32 %v713, %v703
    %v715 = vadd.s32 %v714, %v705
    %v716 = vand.u32 %v693, 65535
    %v717 = vshrl.u32 %v693, 16
    %v718 = vand.u32 %v688, 65535
    %v719 = vshrl.u32 %v688, 16
    %v720 = vmul.u32 %v716, %v718
    %v721 = vmul.u32 %v716, %v719
    %v722 = vmul.u32 %v717, %v718
    %v723 = vmul.u32 %v717, %v719
    %v724 = vshll.u32 %v721, 16
    %v725 = vshrl.u32 %v721, 16
    %v726 = vshll.u32 %v722, 16
    %v727 = vshrl.u32 %v722, 16
    %vm728 = vc.u32 %v720, %v724
    %v729 = vsel %vm728, 1, 0
    %v730 = vadd.s32 %v720, %v724
    %v731 = vadd.s32 %v723, %v729
    %vm732 = vc.u32 %v730, %v726
    %v733 = vsel %vm732, 1, 0
    %v734 = vadd.s32 %v730, %v726
    %v735 = vadd.s32 %v731, %v733
    %v736 = vadd.s32 %v735, %v725
    %v737 = vadd.s32 %v736, %v727
    %v738 = vmul.u32 %v693, %v684
    %v739 = vadd.s32 %v715, %v734
    %vm740 = vc.u32 %v715, %v734
    %v741 = vadd.s32 %v737, 1
    %v742 = vsel %vm740, %v741, %v737
    %v743 = vadd.s32 %v738, %v742
    %v744 = vadd.s32 %v743, 536870912
    %v745 = vshrl.u32 %v744, 30
    %v746 = vshll.u32 %v745, 30
    %v747 = vsub.s32 %v743, %v746
    %vm748 = vcmp.lt.s32.totalorder %v747, 0
    %v749 = vsub.s32 0, %v747
    %v750 = vsel %vm748, %v749, %v747
    %v751 = vclz %v750
    %v752 = vsub.s32 %v751, 2
    %vm753 = vcmp.gt.s32.totalorder 0, %v752
    %v754 = vsel %vm753, 0, %v752
    %v755 = vsub.s32 32, %v754
    %v756 = vshll.u32 %v747, %v754
    %v757 = vshrl.u32 %v739, %v755
    %v758 = vor.u32 %v756, %v757
    %v759 = vsub.s32 4294967266, %v754
    %v760 = vadd.s32 %v759, 127
    %v761 = vshll.u32 %v760, 23
    %v762 = vor.u32 4788187, %v761
    %v763 = vand.u32 2147483647, %v762
    %v765 = vcvt.s32.f32 %v758
    %v766 = vmul.f32 %v765, %v763
    %v767 = vxor.u32 %v766, 2147483648
    %v768 = vsel %vm647, %v767, %v766
    %v769 = vsub.s32 4, %v745
    %v770 = vsel %vm647, %v769, %v745
    %v771 = vsel %vm646, %v644, %v768
    %v772 = vsel %vm646, 0, %v770
    %v773 = vmul.f32 %v771, %v771
    %v774 = vmul.f32 %v773, -0.001358992
    %v775 = vadd.f32 %v774, 0.041655596
    %v776 = vmul.f32 %v773, %v775
    %v777 = vadd.f32 %v776, -0.4999988
    %v778 = vmul.f32 %v773, %v777
    %v779 = vadd.f32 1.0, %v778
    %v780 = vmul.f32 %v771, %v771
    %v781 = vmul.f32 %v780, -0.00019511016
    %v782 = vadd.f32 %v781, 0.008332121
    %v783 = vmul.f32 %v780, %v782
    %v784 = vadd.f32 %v783, -0.16666654
    %v785 = vmul.f32 %v780, %v784
    %v786 = vadd.f32 %v785, 1.0
    %v787 = vmul.f32 %v786, %v771
    %vm788 = vweird.f32 %v644
    %v789 = vadd.s32 %v772, 3
    %v790 = vand.u32 %v789, 3
    %vm791 = vcmp.lt.s32.totalorder %v790, 2
    %vm792 = vcmp.eq.s32.totalorder %v790, 0
    %v793 = vxor.u32 %v787, 2147483648
    %v794 = vsel %vm792, %v779, %v793
    %vm795 = vcmp.eq.s32.totalorder %v790, 2
    %v796 = vxor.u32 %v779, 2147483648
    %v797 = vsel %vm795, %v796, %v787
    %v798 = vsel %vm791, %v794, %v797
    %v799 = vsel %vm788, nan, %v798
    %v800 = vand.u32 2147483647, %v644
    %vm801 = vcmp.le.f32.partialorder %v800, 0.7853982
    %vm802 = vcmp.lt.s32.totalorder %v644, 0
    %v803 = vand.u32 %v644, 2139095040
    %v804 = vshrl.u32 %v803, 23
    %v805 = vsub.s32 %v804, 127
    %v806 = vand.u32 2147483647, %v644
    %v807 = vand.u32 %v806, 8388607
    %v808 = vor.u32 %v807, 8388608
    %v809 = vsub.s32 0, %v808
    %v810 = vadd.s32 %v805, 1
    %vm811 = vcmp.gt.s32.totalorder %v810, 0
    %v812 = vsel %vm811, %v810, 0
    %v813 = vshrl.u32 %v812, 5
    %v814 = vand.u32 %v812, 31
    %v815 = vsub.s32 32, %v814
    %v816 = vshrl.u32 683565275, %v815
    %v817 = vshll.u32 683565275, %v814
    %v818 = vshrl.u32 2475754826, %v815
    %v819 = vor.u32 %v817, %v818
    %v820 = vshll.u32 2475754826, %v814
    %v821 = vshrl.u32 2131351028, %v815
    %v822 = vor.u32 %v820, %v821
    %v823 = vshll.u32 2131351028, %v814
    %v824 = vshrl.u32 2102212464, %v815
    %v825 = vor.u32 %v823, %v824
    %v826 = vshll.u32 2102212464, %v814
    %v827 = vshrl.u32 920167782, %v815
    %v828 = vor.u32 %v826, %v827
    %v829 = vshll.u32 920167782, %v814
    %v830 = vshrl.u32 1326507024, %v815
    %v831 = vor.u32 %v829, %v830
    %vm832 = vcmp.lt.s32.totalorder %v813, 1
    %vm833 = vcmp.lt.s32.totalorder %v813, 2
    %vm834 = vcmp.lt.s32.totalorder %v813, 3
    %vm835 = vcmp.lt.s32.totalorder %v813, 4
    %v836 = vsel %vm832, %v816, %v819
    %v837 = vsel %vm835, %v825, 2102212464
    %v838 = vsel %vm834, %v822, %v837
    %v839 = vsel %vm833, %v836, %v838
    %v840 = vsel %vm832, %v819, %v822
    %v841 = vsel %vm835, %v828, 920167782
    %v842 = vsel %vm834, %v825, %v841
    %v843 = vsel %vm833, %v840, %v842
    %v844 = vsel %vm832, %v822, %v825
    %v845 = vsel %vm835, %v831, 1326507024
    %v846 = vsel %vm834, %v828, %v845
    %v847 = vsel %vm833, %v844, %v846
    %v848 = vshll.u32 %v808, 8
    %v849 = vand.u32 %v848, 65535
    %v850 = vshrl.u32 %v848, 16
    %v851 = vand.u32 %v847, 65535
    %v852 = vshrl.u32 %v847, 16
    %v853 = vmul.u32 %v849, %v851
    %v854 = vmul.u32 %v849, %v852
    %v855 = vmul.u32 %v850, %v851
    %v856 = vmul.u32 %v850, %v852
    %v857 = vshll.u32 %v854, 16
    %v858 = vshrl.u32 %v854, 16
    %v859 = vshll.u32 %v855, 16
    %v860 = vshrl.u32 %v855, 16
    %vm861 = vc.u32 %v853, %v857
    %v862 = vsel %vm861, 1, 0
    %v863 = vadd.s32 %v853, %v857
    %v864 = vadd.s32 %v856, %v862
    %vm865 = vc.u32 %v863, %v859
    %v866 = vsel %vm865, 1, 0
    %v867 = vadd.s32 %v863, %v859
    %v868 = vadd.s32 %v864, %v866
    %v869 = vadd.s32 %v868, %v858
    %v870 = vadd.s32 %v869, %v860
    %v871 = vand.u32 %v848, 65535
    %v872 = vshrl.u32 %v848, 16
    %v873 = vand.u32 %v843, 65535
    %v874 = vshrl.u32 %v843, 16
    %v875 = vmul.u32 %v871, %v873
    %v876 = vmul.u32 %v871, %v874
    %v877 = vmul.u32 %v872, %v873
    %v878 = vmul.u32 %v872, %v874
    %v879 = vshll.u32 %v876, 16
    %v880 = vshrl.u32 %v876, 16
    %v881 = vshll.u32 %v877, 16
    %v882 = vshrl.u32 %v877, 16
    %vm883 = vc.u32 %v875, %v879
    %v884 = vsel %vm883, 1, 0
    %v885 = vadd.s32 %v875, %v879
    %v886 = vadd.s32 %v878, %v884
    %vm887 = vc.u32 %v885, %v881
    %v888 = vsel %vm887, 1, 0
    %v889 = vadd.s32 %v885, %v881
    %v890 = vadd.s32 %v886, %v888
    %v891 = vadd.s32 %v890, %v880
    %v892 = vadd.s32 %v891, %v882
    %v893 = vmul.u32 %v848, %v839
    %v894 = vadd.s32 %v870, %v889
    %vm895 = vc.u32 %v870, %v889
    %v896 = vadd.s32 %v892, 1
    %v897 = vsel %vm895, %v896, %v892
    %v898 = vadd.s32 %v893, %v897
    %v899 = vadd.s32 %v898, 536870912
    %v900 = vshrl.u32 %v899, 30
    %v901 = vshll.u32 %v900, 30
    %v902 = vsub.s32 %v898, %v901
    %vm903 = vcmp.lt.s32.totalorder %v902, 0
    %v904 = vsub.s32 0, %v902
    %v905 = vsel %vm903, %v904, %v902
    %v906 = vclz %v905
    %v907 = vsub.s32 %v906, 2
    %vm908 = vcmp.gt.s32.totalorder 0, %v907
    %v909 = vsel %vm908, 0, %v907
    %v910 = vsub.s32 32, %v909
    %v911 = vshll.u32 %v902, %v909
    %v912 = vshrl.u32 %v894, %v910
    %v913 = vor.u32 %v911, %v912
    %v914 = vsub.s32 4294967266, %v909
    %v915 = vadd.s32 %v914, 127
    %v916 = vshll.u32 %v915, 23
    %v917 = vor.u32 4788187, %v916
    %v918 = vand.u32 2147483647, %v917
    %v920 = vcvt.s32.f32 %v913
    %v921 = vmul.f32 %v920, %v918
    %v922 = vxor.u32 %v921, 2147483648
    %v923 = vsel %vm802, %v922, %v921
    %v924 = vsub.s32 4, %v900
    %v925 = vsel %vm802, %v924, %v900
    %v926 = vsel %vm801, %v644, %v923
    %v927 = vsel %vm801, 0, %v925
    %v928 = vmul.f32 %v926, %v926
    %v929 = vmul.f32 %v928, -0.001358992
    %v930 = vadd.f32 %v929, 0.041655596
    %v931 = vmul.f32 %v928, %v930
    %v932 = vadd.f32 %v931, -0.4999988
    %v933 = vmul.f32 %v928, %v932
    %v934 = vadd.f32 1.0, %v933
    %v935 = vmul.f32 %v926, %v926
    %v936 = vmul.f32 %v935, -0.00019511016
    %v937 = vadd.f32 %v936, 0.008332121
    %v938 = vmul.f32 %v935, %v937
    %v939 = vadd.f32 %v938, -0.16666654
    %v940 = vmul.f32 %v935, %v939
    %v941 = vadd.f32 %v940, 1.0
    %v942 = vmul.f32 %v941, %v926
    %vm943 = vweird.f32 %v644
    %v944 = vand.u32 %v927, 3
    %vm945 = vcmp.lt.s32.totalorder %v944, 2
    %vm946 = vcmp.eq.s32.totalorder %v944, 0
    %v947 = vxor.u32 %v942, 2147483648
    %v948 = vsel %vm946, %v934, %v947
    %vm949 = vcmp.eq.s32.totalorder %v944, 2
    %v950 = vxor.u32 %v934, 2147483648
    %v951 = vsel %vm949, %v950, %v942
    %v952 = vsel %vm945, %v948, %v951
    %v953 = vsel %vm943, nan, %v952
    %v954 = vmul.f32 %v23, 25.132742
    %v955 = vand.u32 2147483647, %v954
    %vm956 = vcmp.le.f32.partialorder %v955, 0.7853982
    %vm957 = vcmp.lt.s32.totalorder %v954, 0
    %v958 = vand.u32 %v954, 2139095040
    %v959 = vshrl.u32 %v958, 23
    %v960 = vsub.s32 %v959, 127
    %v961 = vand.u32 2147483647, %v954
    %v962 = vand.u32 %v961, 8388607
    %v963 = vor.u32 %v962, 8388608
    %v964 = vsub.s32 0, %v963
    %v965 = vadd.s32 %v960, 1
    %vm966 = vcmp.gt.s32.totalorder %v965, 0
    %v967 = vsel %vm966, %v965, 0
    %v968 = vshrl.u32 %v967, 5
    %v969 = vand.u32 %v967, 31
    %v970 = vsub.s32 32, %v969
    %v971 = vshrl.u32 683565275, %v970
    %v972 = vshll.u32 683565275, %v969
    %v973 = vshrl.u32 2475754826, %v970
    %v974 = vor.u32 %v972, %v973
    %v975 = vshll.u32 2475754826, %v969
    %v976 = vshrl.u32 2131351028, %v970
    %v977 = vor.u32 %v975, %v976
    %v978 = vshll.u32 2131351028, %v969
    %v979 = vshrl.u32 2102212464, %v970
    %v980 = vor.u32 %v978, %v979
    %v981 = vshll.u32 2102212464, %v969
    %v982 = vshrl.u32 920167782, %v970
    %v983 = vor.u32 %v981, %v982
    %v984 = vshll.u32 920167782, %v969
    %v985 = vshrl.u32 1326507024, %v970
    %v986 = vor.u32 %v984, %v985
    %vm987 = vcmp.lt.s32.totalorder %v968, 1
    %vm988 = vcmp.lt.s32.totalorder %v968, 2
    %vm989 = vcmp.lt.s32.totalorder %v968, 3
    %vm990 = vcmp.lt.s32.totalorder %v968, 4
    %v991 = vsel %vm987, %v971, %v974
    %v992 = vsel %vm990, %v980, 2102212464
    %v993 = vsel %vm989, %v977, %v992
    %v994 = vsel %vm988, %v991, %v993
    %v995 = vsel %vm987, %v974, %v977
    %v996 = vsel %vm990, %v983, 920167782
    %v997 = vsel %vm989, %v980, %v996
    %v998 = vsel %vm988, %v995, %v997
    %v999 = vsel %vm987, %v977, %v980
    %v1000 = vsel %vm990, %v986, 1326507024
    %v1001 = vsel %vm989, %v983, %v1000
    %v1002 = vsel %vm988, %v999, %v1001
    %v1003 = vshll.u32 %v963, 8
    %v1004 = vand.u32 %v1003, 65535
    %v1005 = vshrl.u32 %v1003, 16
    %v1006 = vand.u32 %v1002, 65535
    %v1007 = vshrl.u32 %v1002, 16
    %v1008 = vmul.u32 %v1004, %v1006
    %v1009 = vmul.u32 %v1004, %v1007
    %v1010 = vmul.u32 %v1005, %v1006
    %v1011 = vmul.u32 %v1005, %v1007
    %v1012 = vshll.u32 %v1009, 16
    %v1013 = vshrl.u32 %v1009, 16
    %v1014 = vshll.u32 %v1010, 16
    %v1015 = vshrl.u32 %v1010, 16
    %vm1016 = vc.u32 %v1008, %v1012
    %v1017 = vsel %vm1016, 1, 0
    %v1018 = vadd.s32 %v1008, %v1012
    %v1019 = vadd.s32 %v1011, %v1017
    %vm1020 = vc.u32 %v1018, %v1014
    %v1021 = vsel %vm1020, 1, 0
    %v1022 = vadd.s32 %v1018, %v1014
    %v1023 = vadd.s32 %v1019, %v1021
    %v1024 = vadd.s32 %v1023, %v1013
    %v1025 = vadd.s32 %v1024, %v1015
    %v1026 = vand.u32 %v1003, 65535
    %v1027 = vshrl.u32 %v1003, 16
    %v1028 = vand.u32 %v998, 65535
    %v1029 = vshrl.u32 %v998, 16
    %v1030 = vmul.u32 %v1026, %v1028
    %v1031 = vmul.u32 %v1026, %v1029
    %v1032 = vmul.u32 %v1027, %v1028
    %v1033 = vmul.u32 %v1027, %v1029
    %v1034 = vshll.u32 %v1031, 16
    %v1035 = vshrl.u32 %v1031, 16
    %v1036 = vshll.u32 %v1032, 16
    %v1037 = vshrl.u32 %v1032, 16
    %vm1038 = vc.u32 %v1030, %v1034
    %v1039 = vsel %vm1038, 1, 0
    %v1040 = vadd.s32 %v1030, %v1034
    %v1041 = vadd.s32 %v1033, %v1039
    %vm1042 = vc.u32 %v1040, %v1036
    %v1043 = vsel %vm1042, 1, 0
    %v1044 = vadd.s32 %v1040, %v1036
    %v1045 = vadd.s32 %v1041, %v1043
    %v1046 = vadd.s32 %v1045, %v1035
    %v1047 = vadd.s32 %v1046, %v1037
    %v1048 = vmul.u32 %v1003, %v994
    %v1049 = vadd.s32 %v1025, %v1044
    %vm1050 = vc.u32 %v1025, %v1044
    %v1051 = vadd.s32 %v1047, 1
    %v1052 = vsel %vm1050, %v1051, %v1047
    %v1053 = vadd.s32 %v1048, %v1052
    %v1054 = vadd.s32 %v1053, 536870912
    %v1055 = vshrl.u32 %v1054, 30
    %v1056 = vshll.u32 %v1055, 30
    %v1057 = vsub.s32 %v1053, %v1056
    %vm1058 = vcmp.lt.s32.totalorder %v1057, 0
    %v1059 = vsub.s32 0, %v1057
    %v1060 = vsel %vm1058, %v1059, %v1057
    %v1061 = vclz %v1060
    %v1062 = vsub.s32 %v1061, 2
    %vm1063 = vcmp.gt.s32.totalorder 0, %v1062
    %v1064 = vsel %vm1063, 0, %v1062
    %v1065 = vsub.s32 32, %v1064
    %v1066 = vshll.u32 %v1057, %v1064
    %v1067 = vshrl.u32 %v1049, %v1065
    %v1068 = vor.u32 %v1066, %v1067
    %v1069 = vsub.s32 4294967266, %v1064
    %v1070 = vadd.s32 %v1069, 127
    %v1071 = vshll.u32 %v1070, 23
    %v1072 = vor.u32 4788187, %v1071
    %v1073 = vand.u32 2147483647, %v1072
    %v1075 = vcvt.s32.f32 %v1068
    %v1076 = vmul.f32 %v1075, %v1073
    %v1077 = vxor.u32 %v1076, 2147483648
    %v1078 = vsel %vm957, %v1077, %v1076
    %v1079 = vsub.s32 4, %v1055
    %v1080 = vsel %vm957, %v1079, %v1055
    %v1081 = vsel %vm956, %v954, %v1078
    %v1082 = vsel %vm956, 0, %v1080
    %v1083 = vmul.f32 %v1081, %v1081
    %v1084 = vmul.f32 %v1083, -0.001358992
    %v1085 = vadd.f32 %v1084, 0.041655596
    %v1086 = vmul.f32 %v1083, %v1085
    %v1087 = vadd.f32 %v1086, -0.4999988
    %v1088 = vmul.f32 %v1083, %v1087
    %v1089 = vadd.f32 1.0, %v1088
    %v1090 = vmul.f32 %v1081, %v1081
    %v1091 = vmul.f32 %v1090, -0.00019511016
    %v1092 = vadd.f32 %v1091, 0.008332121
    %v1093 = vmul.f32 %v1090, %v1092
    %v1094 = vadd.f32 %v1093, -0.16666654
    %v1095 = vmul.f32 %v1090, %v1094
    %v1096 = vadd.f32 %v1095, 1.0
    %v1097 = vmul.f32 %v1096, %v1081
    %vm1098 = vweird.f32 %v954
    %v1099 = vadd.s32 %v1082, 3
    %v1100 = vand.u32 %v1099, 3
    %vm1101 = vcmp.lt.s32.totalorder %v1100, 2
    %vm1102 = vcmp.eq.s32.totalorder %v1100, 0
    %v1103 = vxor.u32 %v1097, 2147483648
    %v1104 = vsel %vm1102, %v1089, %v1103
    %vm1105 = vcmp.eq.s32.totalorder %v1100, 2
    %v1106 = vxor.u32 %v1089, 2147483648
    %v1107 = vsel %vm1105, %v1106, %v1097
    %v1108 = vsel %vm1101, %v1104, %v1107
    %v1109 = vsel %vm1098, nan, %v1108
    %v1110 = vand.u32 2147483647, %v954
    %vm1111 = vcmp.le.f32.partialorder %v1110, 0.7853982
    %vm1112 = vcmp.lt.s32.totalorder %v954, 0
    %v1113 = vand.u32 %v954, 2139095040
    %v1114 = vshrl.u32 %v1113, 23
    %v1115 = vsub.s32 %v1114, 127
    %v1116 = vand.u32 2147483647, %v954
    %v1117 = vand.u32 %v1116, 8388607
    %v1118 = vor.u32 %v1117, 8388608
    %v1119 = vsub.s32 0, %v1118
    %v1120 = vadd.s32 %v1115, 1
    %vm1121 = vcmp.gt.s32.totalorder %v1120, 0
    %v1122 = vsel %vm1121, %v1120, 0
    %v1123 = vshrl.u32 %v1122, 5
    %v1124 = vand.u32 %v1122, 31
    %v1125 = vsub.s32 32, %v1124
    %v1126 = vshrl.u32 683565275, %v1125
    %v1127 = vshll.u32 683565275, %v1124
    %v1128 = vshrl.u32 2475754826, %v1125
    %v1129 = vor.u32 %v1127, %v1128
    %v1130 = vshll.u32 2475754826, %v1124
    %v1131 = vshrl.u32 2131351028, %v1125
    %v1132 = vor.u32 %v1130, %v1131
    %v1133 = vshll.u32 2131351028, %v1124
    %v1134 = vshrl.u32 2102212464, %v1125
    %v1135 = vor.u32 %v1133, %v1134
    %v1136 = vshll.u32 2102212464, %v1124
    %v1137 = vshrl.u32 920167782, %v1125
    %v1138 = vor.u32 %v1136, %v1137
    %v1139 = vshll.u32 920167782, %v1124
    %v1140 = vshrl.u32 1326507024, %v1125
    %v1141 = vor.u32 %v1139, %v1140
    %vm1142 = vcmp.lt.s32.totalorder %v1123, 1
    %vm1143 = vcmp.lt.s32.totalorder %v1123, 2
    %vm1144 = vcmp.lt.s32.totalorder %v1123, 3
    %vm1145 = vcmp.lt.s32.totalorder %v1123, 4
    %v1146 = vsel %vm1142, %v1126, %v1129
    %v1147 = vsel %vm1145, %v1135, 2102212464
    %v1148 = vsel %vm1144, %v1132, %v1147
    %v1149 = vsel %vm1143, %v1146, %v1148
    %v1150 = vsel %vm1142, %v1129, %v1132
    %v1151 = vsel %vm1145, %v1138, 920167782
    %v1152 = vsel %vm1144, %v1135, %v1151
    %v1153 = vsel %vm1143, %v1150, %v1152
    %v1154 = vsel %vm1142, %v1132, %v1135
    %v1155 = vsel %vm1145, %v1141, 1326507024
    %v1156 = vsel %vm1144, %v1138, %v1155
    %v1157 = vsel %vm1143, %v1154, %v1156
    %v1158 = vshll.u32 %v1118, 8
    %v1159 = vand.u32 %v1158, 65535
    %v1160 = vshrl.u32 %v1158, 16
    %v1161 = vand.u32 %v1157, 65535
    %v1162 = vshrl.u32 %v1157, 16
    %v1163 = vmul.u32 %v1159, %v1161
    %v1164 = vmul.u32 %v1159, %v1162
    %v1165 = vmul.u32 %v1160, %v1161
    %v1166 = vmul.u32 %v1160, %v1162
    %v1167 = vshll.u32 %v1164, 16
    %v1168 = vshrl.u32 %v1164, 16
    %v1169 = vshll.u32 %v1165, 16
    %v1170 = vshrl.u32 %v1165, 16
    %vm1171 = vc.u32 %v1163, %v1167
    %v1172 = vsel %vm1171, 1, 0
    %v1173 = vadd.s32 %v1163, %v1167
    %v1174 = vadd.s32 %v1166, %v1172
    %vm1175 = vc.u32 %v1173, %v1169
    %v1176 = vsel %vm1175, 1, 0
    %v1177 = vadd.s32 %v1173, %v1169
    %v1178 = vadd.s32 %v1174, %v1176
    %v1179 = vadd.s32 %v1178, %v1168
    %v1180 = vadd.s32 %v1179, %v1170
    %v1181 = vand.u32 %v1158, 65535
    %v1182 = vshrl.u32 %v1158, 16
    %v1183 = vand.u32 %v1153, 65535
    %v1184 = vshrl.u32 %v1153, 16
    %v1185 = vmul.u32 %v1181, %v1183
    %v1186 = vmul.u32 %v1181, %v1184
    %v1187 = vmul.u32 %v1182, %v1183
    %v1188 = vmul.u32 %v1182, %v1184
    %v1189 = vshll.u32 %v1186, 16
    %v1190 = vshrl.u32 %v1186, 16
    %v1191 = vshll.u32 %v1187, 16
    %v1192 = vshrl.u32 %v1187, 16
    %vm1193 = vc.u32 %v1185, %v1189
    %v1194 = vsel %vm1193, 1, 0
    %v1195 = vadd.s32 %v1185, %v1189
    %v1196 = vadd.s32 %v1188, %v1194
    %vm1197 = vc.u32 %v1195, %v1191
    %v1198 = vsel %vm1197, 1, 0
    %v1199 = vadd.s32 %v1195, %v1191
    %v1200 = vadd.s32 %v1196, %v1198
    %v1201 = vadd.s32 %v1200, %v1190
    %v1202 = vadd.s32 %v1201, %v1192
    %v1203 = vmul.u32 %v1158, %v1149
    %v1204 = vadd.s32 %v1180, %v1199
    %vm1205 = vc.u32 %v1180, %v1199
    %v1206 = vadd.s32 %v1202, 1
    %v1207 = vsel %vm1205, %v1206, %v1202
    %v1208 = vadd.s32 %v1203, %v1207
    %v1209 = vadd.s32 %v1208, 536870912
    %v1210 = vshrl.u32 %v1209, 30
    %v1211 = vshll.u32 %v1210, 30
    %v1212 = vsub.s32 %v1208, %v1211
    %vm1213 = vcmp.lt.s32.totalorder %v1212, 0
    %v1214 = vsub.s32 0, %v1212
    %v1215 = vsel %vm1213, %v1214, %v1212
    %v1216 = vclz %v1215
    %v1217 = vsub.s32 %v1216, 2
    %vm1218 = vcmp.gt.s32.totalorder 0, %v1217
    %v1219 = vsel %vm1218, 0, %v1217
    %v1220 = vsub.s32 32, %v1219
    %v1221 = vshll.u32 %v1212, %v1219
    %v1222 = vshrl.u32 %v1204, %v1220
    %v1223 = vor.u32 %v1221, %v1222
    %v1224 = vsub.s32 4294967266, %v1219
    %v1225 = vadd.s32 %v1224, 127
    %v1226 = vshll.u32 %v1225, 23
    %v1227 = vor.u32 4788187, %v1226
    %v1228 = vand.u32 2147483647, %v1227
    %v1230 = vcvt.s32.f32 %v1223
    %v1231 = vmul.f32 %v1230, %v1228
    %v1232 = vxor.u32 %v1231, 2147483648
    %v1233 = vsel %vm1112, %v1232, %v1231
    %v1234 = vsub.s32 4, %v1210
    %v1235 = vsel %vm1112, %v1234, %v1210
    %v1236 = vsel %vm1111, %v954, %v1233
    %v1237 = vsel %vm1111, 0, %v1235
    %v1238 = vmul.f32 %v1236, %v1236
    %v1239 = vmul.f32 %v1238, -0.001358992
    %v1240 = vadd.f32 %v1239, 0.041655596
    %v1241 = vmul.f32 %v1238, %v1240
    %v1242 = vadd.f32 %v1241, -0.4999988
    %v1243 = vmul.f32 %v1238, %v1242
    %v1244 = vadd.f32 1.0, %v1243
    %v1245 = vmul.f32 %v1236, %v1236
    %v1246 = vmul.f32 %v1245, -0.00019511016
    %v1247 = vadd.f32 %v1246, 0.008332121
    %v1248 = vmul.f32 %v1245, %v1247
    %v1249 = vadd.f32 %v1248, -0.16666654
    %v1250 = vmul.f32 %v1245, %v1249
    %v1251 = vadd.f32 %v1250, 1.0
    %v1252 = vmul.f32 %v1251, %v1236
    %vm1253 = vweird.f32 %v954
    %v1254 = vand.u32 %v1237, 3
    %vm1255 = vcmp.lt.s32.totalorder %v1254, 2
    %vm1256 = vcmp.eq.s32.totalorder %v1254, 0
    %v1257 = vxor.u32 %v1252, 2147483648
    %v1258 = vsel %vm1256, %v1244, %v1257
    %vm1259 = vcmp.eq.s32.totalorder %v1254, 2
    %v1260 = vxor.u32 %v1244, 2147483648
    %v1261 = vsel %vm1259, %v1260, %v1252
    %v1262 = vsel %vm1255, %v1258, %v1261
    %v1263 = vsel %vm1253, nan, %v1262
    %v1264 = vmul.f32 %v23, 50.265484
    %v1265 = vand.u32 2147483647, %v1264
    %vm1266 = vcmp.le.f32.partialorder %v1265, 0.7853982
    %vm1267 = vcmp.lt.s32.totalorder %v1264, 0
    %v1268 = vand.u32 %v1264, 2139095040
    %v1269 = vshrl.u32 %v1268, 23
    %v1270 = vsub.s32 %v1269, 127
    %v1271 = vand.u32 2147483647, %v1264
    %v1272 = vand.u32 %v1271, 8388607
    %v1273 = vor.u32 %v1272, 8388608
    %v1274 = vsub.s32 0, %v1273
    %v1275 = vadd.s32 %v1270, 1
    %vm1276 = vcmp.gt.s32.totalorder %v1275, 0
    %v1277 = vsel %vm1276, %v1275, 0
    %v1278 = vshrl.u32 %v1277, 5
    %v1279 = vand.u32 %v1277, 31
    %v1280 = vsub.s32 32, %v1279
    %v1281 = vshrl.u32 683565275, %v1280
    %v1282 = vshll.u32 683565275, %v1279
    %v1283 = vshrl.u32 2475754826, %v1280
    %v1284 = vor.u32 %v1282, %v1283
    %v1285 = vshll.u32 2475754826, %v1279
    %v1286 = vshrl.u32 2131351028, %v1280
    %v1287 = vor.u32 %v1285, %v1286
    %v1288 = vshll.u32 2131351028, %v1279
    %v1289 = vshrl.u32 2102212464, %v1280
    %v1290 = vor.u32 %v1288, %v1289
    %v1291 = vshll.u32 2102212464, %v1279
    %v1292 = vshrl.u32 920167782, %v1280
    %v1293 = vor.u32 %v1291, %v1292
    %v1294 = vshll.u32 920167782, %v1279
    %v1295 = vshrl.u32 1326507024, %v1280
    %v1296 = vor.u32 %v1294, %v1295
    %vm1297 = vcmp.lt.s32.totalorder %v1278, 1
    %vm1298 = vcmp.lt.s32.totalorder %v1278, 2
    %vm1299 = vcmp.lt.s32.totalorder %v1278, 3
    %vm1300 = vcmp.lt.s32.totalorder %v1278, 4
    %v1301 = vsel %vm1297, %v1281, %v1284
    %v1302 = vsel %vm1300, %v1290, 2102212464
    %v1303 = vsel %vm1299, %v1287, %v1302
    %v1304 = vsel %vm1298, %v1301, %v1303
    %v1305 = vsel %vm1297, %v1284, %v1287
    %v1306 = vsel %vm1300, %v1293, 920167782
    %v1307 = vsel %vm1299, %v1290, %v1306
    %v1308 = vsel %vm1298, %v1305, %v1307
    %v1309 = vsel %vm1297, %v1287, %v1290
    %v1310 = vsel %vm1300, %v1296, 1326507024
    %v1311 = vsel %vm1299, %v1293, %v1310
    %v1312 = vsel %vm1298, %v1309, %v1311
    %v1313 = vshll.u32 %v1273, 8
    %v1314 = vand.u32 %v1313, 65535
    %v1315 = vshrl.u32 %v1313, 16
    %v1316 = vand.u32 %v1312, 65535
    %v1317 = vshrl.u32 %v1312, 16
    %v1318 = vmul.u32 %v1314, %v1316
    %v1319 = vmul.u32 %v1314, %v1317
    %v1320 = vmul.u32 %v1315, %v1316
    %v1321 = vmul.u32 %v1315, %v1317
    %v1322 = vshll.u32 %v1319, 16
    %v1323 = vshrl.u32 %v1319, 16
    %v1324 = vshll.u32 %v1320, 16
    %v1325 = vshrl.u32 %v1320, 16
    %vm1326 = vc.u32 %v1318, %v1322
    %v1327 = vsel %vm1326, 1, 0
    %v1328 = vadd.s32 %v1318, %v1322
    %v1329 = vadd.s32 %v1321, %v1327
    %vm1330 = vc.u32 %v1328, %v1324
    %v1331 = vsel %vm1330, 1, 0
    %v1332 = vadd.s32 %v1328, %v1324
    %v1333 = vadd.s32 %v1329, %v1331
    %v1334 = vadd.s32 %v1333, %v1323
    %v1335 = vadd.s32 %v1334, %v1325
    %v1336 = vand.u32 %v1313, 65535
    %v1337 = vshrl.u32 %v1313, 16
    %v1338 = vand.u32 %v1308, 65535
    %v1339 = vshrl.u32 %v1308, 16
    %v1340 = vmul.u32 %v1336, %v1338
    %v1341 = vmul.u32 %v1336, %v1339
    %v1342 = vmul.u32 %v1337, %v1338
    %v1343 = vmul.u32 %v1337, %v1339
    %v1344 = vshll.u32 %v1341, 16
    %v1345 = vshrl.u32 %v1341, 16
    %v1346 = vshll.u32 %v1342, 16
    %v1347 = vshrl.u32 %v1342, 16
    %vm1348 = vc.u32 %v1340, %v1344
    %v1349 = vsel %vm1348, 1, 0
    %v1350 = vadd.s32 %v1340, %v1344
    %v1351 = vadd.s32 %v1343, %v1349
    %vm1352 = vc.u32 %v1350, %v1346
    %v1353 = vsel %vm1352, 1, 0
    %v1354 = vadd.s32 %v1350, %v1346
    %v1355 = vadd.s32 %v1351, %v1353
    %v1356 = vadd.s32 %v1355, %v1345
    %v1357 = vadd.s32 %v1356, %v1347
    %v1358 = vmul.u32 %v1313, %v1304
    %v1359 = vadd.s32 %v1335, %v1354
    %vm1360 = vc.u32 %v1335, %v1354
    %v1361 = vadd.s32 %v1357, 1
    %v1362 = vsel %vm1360, %v1361, %v1357
    %v1363 = vadd.s32 %v1358, %v1362
    %v1364 = vadd.s32 %v1363, 536870912
    %v1365 = vshrl.u32 %v1364, 30
    %v1366 = vshll.u32 %v1365, 30
    %v1367 = vsub.s32 %v1363, %v1366
    %vm1368 = vcmp.lt.s32.totalorder %v1367, 0
    %v1369 = vsub.s32 0, %v1367
    %v1370 = vsel %vm1368, %v1369, %v1367
    %v1371 = vclz %v1370
    %v1372 = vsub.s32 %v1371, 2
    %vm1373 = vcmp.gt.s32.totalorder 0, %v1372
    %v1374 = vsel %vm1373, 0, %v1372
    %v1375 = vsub.s32 32, %v1374
    %v1376 = vshll.u32 %v1367, %v1374
    %v1377 = vshrl.u32 %v1359, %v1375
    %v1378 = vor.u32 %v1376, %v1377
    %v1379 = vsub.s32 4294967266, %v1374
    %v1380 = vadd.s32 %v1379, 127
    %v1381 = vshll.u32 %v1380, 23
    %v1382 = vor.u32 4788187, %v1381
    %v1383 = vand.u32 2147483647, %v1382
    %v1385 = vcvt.s32.f32 %v1378
    %v1386 = vmul.f32 %v1385, %v1383
    %v1387 = vxor.u32 %v1386, 2147483648
    %v1388 = vsel %vm1267, %v1387, %v1386
    %v1389 = vsub.s32 4, %v1365
    %v1390 = vsel %vm1267, %v1389, %v1365
    %v1391 = vsel %vm1266, %v1264, %v1388
    %v1392 = vsel %vm1266, 0, %v1390
    %v1393 = vmul.f32 %v1391, %v1391
    %v1394 = vmul.f32 %v1393, -0.001358992
    %v1395 = vadd.f32 %v1394, 0.041655596
    %v1396 = vmul.f32 %v1393, %v1395
    %v1397 = vadd.f32 %v1396, -0.4999988
    %v1398 = vmul.f32 %v1393, %v1397
    %v1399 = vadd.f32 1.0, %v1398
    %v1400 = vmul.f32 %v1391, %v1391
    %v1401 = vmul.f32 %v1400, -0.00019511016
    %v1402 = vadd.f32 %v1401, 0.008332121
    %v1403 = vmul.f32 %v1400, %v1402
    %v1404 = vadd.f32 %v1403, -0.16666654
    %v1405 = vmul.f32 %v1400, %v1404
    %v1406 = vadd.f32 %v1405, 1.0
    %v1407 = vmul.f32 %v1406, %v1391
    %vm1408 = vweird.f32 %v1264
    %v1409 = vadd.s32 %v1392, 3
    %v1410 = vand.u32 %v1409, 3
    %vm1411 = vcmp.lt.s32.totalorder %v1410, 2
    %vm1412 = vcmp.eq.s32.totalorder %v1410, 0
    %v1413 = vxor.u32 %v1407, 2147483648
    %v1414 = vsel %vm1412, %v1399, %v1413
    %vm1415 = vcmp.eq.s32.totalorder %v1410, 2
    %v1416 = vxor.u32 %v1399, 2147483648
    %v1417 = vsel %vm1415, %v1416, %v1407
    %v1418 = vsel %vm1411, %v1414, %v1417
    %v1419 = vsel %vm1408, nan, %v1418
    %v1420 = vand.u32 2147483647, %v1264
    %vm1421 = vcmp.le.f32.partialorder %v1420, 0.7853982
    %vm1422 = vcmp.lt.s32.totalorder %v1264, 0
    %v1423 = vand.u32 %v1264, 2139095040
    %v1424 = vshrl.u32 %v1423, 23
    %v1425 = vsub.s32 %v1424, 127
    %v1426 = vand.u32 2147483647, %v1264
    %v1427 = vand.u32 %v1426, 8388607
    %v1428 = vor.u32 %v1427, 8388608
    %v1429 = vsub.s32 0, %v1428
    %v1430 = vadd.s32 %v1425, 1
    %vm1431 = vcmp.gt.s32.totalorder %v1430, 0
    %v1432 = vsel %vm1431, %v1430, 0
    %v1433 = vshrl.u32 %v1432, 5
    %v1434 = vand.u32 %v1432, 31
    %v1435 = vsub.s32 32, %v1434
    %v1436 = vshrl.u32 683565275, %v1435
    %v1437 = vshll.u32 683565275, %v1434
    %v1438 = vshrl.u32 2475754826, %v1435
    %v1439 = vor.u32 %v1437, %v1438
    %v1440 = vshll.u32 2475754826, %v1434
    %v1441 = vshrl.u32 2131351028, %v1435
    %v1442 = vor.u32 %v1440, %v1441
    %v1443 = vshll.u32 2131351028, %v1434
    %v1444 = vshrl.u32 2102212464, %v1435
    %v1445 = vor.u32 %v1443, %v1444
    %v1446 = vshll.u32 2102212464, %v1434
    %v1447 = vshrl.u32 920167782, %v1435
    %v1448 = vor.u32 %v1446, %v1447
    %v1449 = vshll.u32 920167782, %v1434
    %v1450 = vshrl.u32 1326507024, %v1435
    %v1451 = vor.u32 %v1449, %v1450
    %vm1452 = vcmp.lt.s32.totalorder %v1433, 1
    %vm1453 = vcmp.lt.s32.totalorder %v1433, 2
    %vm1454 = vcmp.lt.s32.totalorder %v1433, 3
    %vm1455 = vcmp.lt.s32.totalorder %v1433, 4
    %v1456 = vsel %vm1452, %v1436, %v1439
    %v1457 = vsel %vm1455, %v1445, 2102212464
    %v1458 = vsel %vm1454, %v1442, %v1457
    %v1459 = vsel %vm1453, %v1456, %v1458
    %v1460 = vsel %vm1452, %v1439, %v1442
    %v1461 = vsel %vm1455, %v1448, 920167782
    %v1462 = vsel %vm1454, %v1445, %v1461
    %v1463 = vsel %vm1453, %v1460, %v1462
    %v1464 = vsel %vm1452, %v1442, %v1445
    %v1465 = vsel %vm1455, %v1451, 1326507024
    %v1466 = vsel %vm1454, %v1448, %v1465
    %v1467 = vsel %vm1453, %v1464, %v1466
    %v1468 = vshll.u32 %v1428, 8
    %v1469 = vand.u32 %v1468, 65535
    %v1470 = vshrl.u32 %v1468, 16
    %v1471 = vand.u32 %v1467, 65535
    %v1472 = vshrl.u32 %v1467, 16
    %v1473 = vmul.u32 %v1469, %v1471
    %v1474 = vmul.u32 %v1469, %v1472
    %v1475 = vmul.u32 %v1470, %v1471
    %v1476 = vmul.u32 %v1470, %v1472
    %v1477 = vshll.u32 %v1474, 16
    %v1478 = vshrl.u32 %v1474, 16
    %v1479 = vshll.u32 %v1475, 16
    %v1480 = vshrl.u32 %v1475, 16
    %vm1481 = vc.u32 %v1473, %v1477
    %v1482 = vsel %vm1481, 1, 0
    %v1483 = vadd.s32 %v1473, %v1477
    %v1484 = vadd.s32 %v1476, %v1482
    %vm1485 = vc.u32 %v1483, %v1479
    %v1486 = vsel %vm1485, 1, 0
    %v1487 = vadd.s32 %v1483, %v1479
    %v1488 = vadd.s32 %v1484, %v1486
    %v1489 = vadd.s32 %v1488, %v1478
    %v1490 = vadd.s32 %v1489, %v1480
    %v1491 = vand.u32 %v1468, 65535
    %v1492 = vshrl.u32 %v1468, 16
    %v1493 = vand.u32 %v1463, 65535
    %v1494 = vshrl.u32 %v1463, 16
    %v1495 = vmul.u32 %v1491, %v1493
    %v1496 = vmul.u32 %v1491, %v1494
    %v1497 = vmul.u32 %v1492, %v1493
    %v1498 = vmul.u32 %v1492, %v1494
    %v1499 = vshll.u32 %v1496, 16
    %v1500 = vshrl.u32 %v1496, 16
    %v1501 = vshll.u32 %v1497, 16
    %v1502 = vshrl.u32 %v1497, 16
    %vm1503 = vc.u32 %v1495, %v1499
    %v1504 = vsel %vm1503, 1, 0
    %v1505 = vadd.s32 %v1495, %v1499
    %v1506 = vadd.s32 %v1498, %v1504
    %vm1507 = vc.u32 %v1505, %v1501
    %v1508 = vsel %vm1507, 1, 0
    %v1509 = vadd.s32 %v1505, %v1501
    %v1510 = vadd.s32 %v1506, %v1508
    %v1511 = vadd.s32 %v1510, %v1500
    %v1512 = vadd.s32 %v1511, %v1502
    %v1513 = vmul.u32 %v1468, %v1459
    %v1514 = vadd.s32 %v1490, %v1509
    %vm1515 = vc.u32 %v1490, %v1509
    %v1516 = vadd.s32 %v1512, 1
    %v1517 = vsel %vm1515, %v1516, %v1512
    %v1518 = vadd.s32 %v1513, %v1517
    %v1519 = vadd.s32 %v1518, 536870912
    %v1520 = vshrl.u32 %v1519, 30
    %v1521 = vshll.u32 %v1520, 30
    %v1522 = vsub.s32 %v1518, %v1521
    %vm1523 = vcmp.lt.s32.totalorder %v1522, 0
    %v1524 = vsub.s32 0, %v1522
    %v1525 = vsel %vm1523, %v1524, %v1522
    %v1526 = vclz %v1525
    %v1527 = vsub.s32 %v1526, 2
    %vm1528 = vcmp.gt.s32.totalorder 0, %v1527
    %v1529 = vsel %vm1528, 0, %v1527
    %v1530 = vsub.s32 32, %v1529
    %v1531 = vshll.u32 %v1522, %v1529
    %v1532 = vshrl.u32 %v1514, %v1530
    %v1533 = vor.u32 %v1531, %v1532
    %v1534 = vsub.s32 4294967266, %v1529
    %v1535 = vadd.s32 %v1534, 127
    %v1536 = vshll.u32 %v1535, 23
    %v1537 = vor.u32 4788187, %v1536
    %v1538 = vand.u32 2147483647, %v1537
    %v1540 = vcvt.s32.f32 %v1533
    %v1541 = vmul.f32 %v1540, %v1538
    %v1542 = vxor.u32 %v1541, 2147483648
    %v1543 = vsel %vm1422, %v1542, %v1541
    %v1544 = vsub.s32 4, %v1520
    %v1545 = vsel %vm1422, %v1544, %v1520
    %v1546 = vsel %vm1421, %v1264, %v1543
    %v1547 = vsel %vm1421, 0, %v1545
    %v1548 = vmul.f32 %v1546, %v1546
    %v1549 = vmul.f32 %v1548, -0.001358992
    %v1550 = vadd.f32 %v1549, 0.041655596
    %v1551 = vmul.f32 %v1548, %v1550
    %v1552 = vadd.f32 %v1551, -0.4999988
    %v1553 = vmul.f32 %v1548, %v1552
    %v1554 = vadd.f32 1.0, %v1553
    %v1555 = vmul.f32 %v1546, %v1546
    %v1556 = vmul.f32 %v1555, -0.00019511016
    %v1557 = vadd.f32 %v1556, 0.008332121
    %v1558 = vmul.f32 %v1555, %v1557
    %v1559 = vadd.f32 %v1558, -0.16666654
    %v1560 = vmul.f32 %v1555, %v1559
    %v1561 = vadd.f32 %v1560, 1.0
    %v1562 = vmul.f32 %v1561, %v1546
    %vm1563 = vweird.f32 %v1264
    %v1564 = vand.u32 %v1547, 3
    %vm1565 = vcmp.lt.s32.totalorder %v1564, 2
    %vm1566 = vcmp.eq.s32.totalorder %v1564, 0
    %v1567 = vxor.u32 %v1562, 2147483648
    %v1568 = vsel %vm1566, %v1554, %v1567
    %vm1569 = vcmp.eq.s32.totalorder %v1564, 2
    %v1570 = vxor.u32 %v1554, 2147483648
    %v1571 = vsel %vm1569, %v1570, %v1562
    %v1572 = vsel %vm1565, %v1568, %v1571
    %v1573 = vsel %vm1563, nan, %v1572
    %1575 = vrot.lane.b32.xlu0 %v179, 16
    %v1576 = vpop.permute.xlu0 %1575
    %1579 = vrot.lane.b32.xlu0 %v333, 32
    %v1580 = vpop.permute.xlu0 %1579
    %1583 = vrot.lane.b32.xlu0 %v489, 48
    %v1584 = vpop.permute.xlu0 %1583
    %1587 = vrot.lane.b32.xlu0 %v643, 64
    %v1588 = vpop.permute.xlu0 %1587
    %1591 = vrot.lane.b32.xlu0 %v799, 80
    %v1592 = vpop.permute.xlu0 %1591
    %1595 = vrot.lane.b32.xlu0 %v953, 96
    %v1596 = vpop.permute.xlu0 %1595
    %1599 = vrot.lane.b32.xlu0 %v1109, 112
    %v1600 = vpop.permute.xlu0 %1599
    %1603 = vrot.lane.b32.xlu0 %v1419, 16
    %v1604 = vpop.permute.xlu0 %1603
    %1607 = vrot.lane.b32.xlu0 %v1573, 32
    %v1608 = vpop.permute.xlu0 %1607
    %vm1610 = vcmask 130048
    %v1611 = vsel %vm1610, %v23, %v1576
    %vm1612 = vcmask 261120
    %v1613 = vsel %vm1612, %v1611, %v1580
    %vm1614 = vcmask 392192
    %v1615 = vsel %vm1614, %v1613, %v1584
    %vm1616 = vcmask 523264
    %v1617 = vsel %vm1616, %v1615, %v1588
    %vm1618 = vcmask 654336
    %v1619 = vsel %vm1618, %v1617, %v1592
    %vm1620 = vcmask 785408
    %v1621 = vsel %vm1620, %v1619, %v1596
    %vm1622 = vcmask 916480
    %v1623 = vsel %vm1622, %v1621, %v1600
    %v1624 = vsel %vm1610, %v1263, %v1604
    %v1625 = vsel %vm1612, %v1624, %v1608
    %1626 = vst [vmem:[#allocation5] sm:$0xff] %v1623
    %1627 = vst.msk [vmem:[#allocation5 + $0x8] sm:$0xff] %vm1614, %v1625
    // Predicated region
    $region10: #{tpu_custom_call.1} parent=1 // pred_check
      _
    $region11: #{tpu_custom_call.1} parent=1 // pred_check_branch
      %1629 = sbr.rel (0) target = $region13
    $region12: #{tpu_custom_call.1} parent=1 // pred_region
      %1631 = vsyncadd [#allocation4], 0
      %s1633 = sshll.u32 [#allocation5], 4
      %s1634 = int_to_ptr.vmem [resolvable:$true] %s1633
      %s1635 = sshll.u32 %s1, 4
      %s1636 = int_to_ptr.hbm [resolvable:$true] %s1635
      %1638 = dma.vmem_to_hbm [thread:$0]  %s1634, 256, %s1636, [#allocation4]
    $region13: #{tpu_custom_call.1} parent=1 // pred_fallthru
      _
    // Predicated region
    $region14: #{tpu_custom_call.1} parent=1 // pred_check
      _
    $region15: #{tpu_custom_call.1} parent=1 // pred_check_branch
      %1640 = sbr.rel (0) target = $region17
    $region16: #{tpu_custom_call.1} parent=1 // pred_region
      %1642 = dma.done [#allocation4], 256
    $region17: #{tpu_custom_call.1} parent=1 // pred_fallthru
      _
    %1643 = vsyncpa [#allocation3], 1
    %1644 = vsyncpa [#allocation4], 1

</llo_original>
